<compile_context>
chip_gen: v7x
topology: tpu7x:2x2x1
jax: 0.10.0
libtpu: 0.0.40
codegen_flags: <defaults>
</compile_context>

<pallas_src>
import jax
import jax.numpy as jnp
from jax.experimental import pallas as pl
from jax.experimental.pallas import tpu as pltpu

# ----------------------------- model sizes ---------------------------------
N_NODES = 16      # number of graph nodes
IN_CH = 4         # in_channels
OUT_CH = 32       # out_channels (hidden size of the GRU cell)
D_D = 7           # d_d (linear head output)
K_CHEB = 3        # filter_size (Chebyshev order K)
LAMBDA_MAX = 2.0
LANES = 128       # pad fused gate weights to a full lane tile


# ------------------------------ Pallas kernel ------------------------------
def _cheb_basis(L, feat, K):
    """Stack [T_0(L)@feat, T_1(L)@feat, ...] along the lane (feature) axis."""
    Ts = [feat]
    if K > 1:
        Ts.append(jnp.dot(L, feat, preferred_element_type=jnp.float32))
    for _ in range(2, K):
        Ts.append(2.0 * jnp.dot(L, Ts[-1], preferred_element_type=jnp.float32)
                  - Ts[-2])
    return jnp.concatenate(Ts, axis=1) if K > 1 else Ts[0]


def _tgconvgru_kernel(l_ref, x_ref, h0_ref,
                      wf_ref, whc_ref,
                      bzr_ref, bc_ref,
                      wlin_ref, blin_ref,
                      h_out_ref, y_out_ref):
    L = l_ref[...]            # (N, N)    scaled normalized Laplacian
    X = x_ref[...]            # (N, Fin)
    H = h0_ref[...]           # (N, Fout)
    f_out = H.shape[1]

    # One shared Chebyshev basis for the concatenated features [X | H].
    F = jnp.concatenate([X, H], axis=1)           # (N, Fin+Fout)
    TF = _cheb_basis(L, F, K_CHEB)                # (N, K*(Fin+Fout))

    # Single fused, lane-dense gate projection (zero-padded to 128 lanes):
    #   G[:, 0:Fout]        = x_conv_z + h_conv_z
    #   G[:, Fout:2Fout]    = x_conv_r + h_conv_r
    #   G[:, 2Fout:3Fout]   = x_conv_h            (h-conv part comes from H*R)
    G = jnp.dot(TF, wf_ref[...], preferred_element_type=jnp.float32)  # (N, 128)

    zr = jax.nn.sigmoid(G[:, :2 * f_out] + bzr_ref[...])
    Z = zr[:, :f_out]
    R = zr[:, f_out:2 * f_out]

    # Candidate gate: Chebyshev basis of (H * R) must be recomputed (R is
    # data-dependent, so it cannot be folded into the fused matmul above).
    TC = _cheb_basis(L, H * R, K_CHEB)                                   # (N, K*Fout)
    hc = jnp.dot(TC, whc_ref[...], preferred_element_type=jnp.float32)   # (N, Fout)

    H_tilde = jnp.tanh(G[:, 2 * f_out:3 * f_out] + hc + bc_ref[...])
    H_new = Z * H + (1.0 - Z) * H_tilde
    h_out_ref[...] = H_new

    # y = Linear(relu(H_new))
    # TODO(synk): D_D=7 output is a masked 7-lane store; lane-dense packing of
    # y only pays off once batched/rolled out, so it is left as-is here.
    y = jnp.maximum(H_new, 0.0)
    y_out_ref[...] = (jnp.dot(y, wlin_ref[...], preferred_element_type=jnp.float32)
                      + blin_ref[...])


# --------------------- weight packing (JAX side, pre-call) ------------------
def pack_params(Wx, bx, Wh, bh):
    """Flatten the 4-D gate weights into fused 2-D lane-major matrices.

    WF rows are indexed by (k, feature) where feature runs over the
    concatenated [X | H] block:
      WF[k*(Fin+Fout) + i,        g*Fout + o] = Wx[g, k, i, o]        g in {z,r,h}
      WF[k*(Fin+Fout) + Fin + j,  g*Fout + o] = Wh[g, k, j, o]        g in {z,r}
      WF[k*(Fin+Fout) + Fin + j,  2*Fout + o] = 0                     (h-gate uses H*R)
    WhC[k*Fout + j, o] = Wh[2, k, j, o]
    Biases of the x-conv and h-conv are summed per gate (they are always added
    together before the nonlinearity).
    """
    _, K, f_in, f_out = Wx.shape
    Wx_part = jnp.transpose(Wx, (1, 2, 0, 3)).reshape(K, f_in, 3 * f_out)
    Wh_zr = jnp.transpose(Wh[:2], (1, 2, 0, 3)).reshape(K, f_out, 2 * f_out)
    Wh_part = jnp.pad(Wh_zr, ((0, 0), (0, 0), (0, f_out)))   # zero h-gate lanes
    WF = jnp.concatenate([Wx_part, Wh_part], axis=1)
    WF = WF.reshape(K * (f_in + f_out), 3 * f_out)
    WF = jnp.pad(WF, ((0, 0), (0, max(0, LANES - 3 * f_out))))
    WhC = Wh[2].reshape(K * f_out, f_out)
    b_zr = (bx[:2] + bh[:2]).reshape(1, 2 * f_out)
    b_c = (bx[2] + bh[2]).reshape(1, f_out)
    return WF, WhC, b_zr, b_c


def _tgconvgru_forward(L_hat, x, h0, Wx, bx, Wh, bh, Wlin, blin):
    n, f_out = h0.shape
    WF, WhC, b_zr, b_c = pack_params(Wx, bx, Wh, bh)
    vmem = pl.BlockSpec(memory_space=pltpu.MemorySpace.VMEM)
    return pl.pallas_call(
        _tgconvgru_kernel,
        out_shape=(jax.ShapeDtypeStruct((n, f_out), jnp.float32),
                   jax.ShapeDtypeStruct((n, D_D), jnp.float32)),
        in_specs=[vmem] * 9,
        out_specs=(vmem, vmem),
    )(L_hat, x, h0, WF, WhC, b_zr, b_c, Wlin, blin)


tgconvgru_forward = jax.jit(_tgconvgru_forward)


# ------------------------- graph normalization (glue) ----------------------
def cheb_scaled_laplacian(edge_index, edge_weight, num_nodes, lambda_max):
    """Dense L_hat = 2*(I - D^-1/2 A D^-1/2)/lambda_max - I  (PyG 'sym' norm)."""
    row, col = edge_index[0], edge_index[1]
    deg = jnp.zeros((num_nodes,), jnp.float32).at[row].add(edge_weight)
    dis = jnp.where(deg > 0, 1.0 / jnp.sqrt(deg), 0.0)
    norm_w = -dis[row] * edge_weight * dis[col]
    # message passing writes to the target node: L[dst, src] = norm_w
    L = jnp.zeros((num_nodes, num_nodes), jnp.float32).at[col, row].add(norm_w)
    L = L + jnp.eye(num_nodes, dtype=jnp.float32)
    L_hat = (2.0 / lambda_max) * L - jnp.eye(num_nodes, dtype=jnp.float32)
    return L_hat


# ------------------------------ pure-JAX reference -------------------------
def ref_forward(L, X, H, Wx, bx, Wh, bh, Wl, bl):
    def cheb(feat, W, b):
        Tx0, out = feat, feat @ W[0]
        Tx1 = L @ feat
        out = out + Tx1 @ W[1]
        for k in range(2, W.shape[0]):
            Tx2 = 2.0 * (L @ Tx1) - Tx0
            out = out + Tx2 @ W[k]
            Tx0, Tx1 = Tx1, Tx2
        return out + b
    Z = jax.nn.sigmoid(cheb(X, Wx[0], bx[0]) + cheb(H, Wh[0], bh[0]))
    R = jax.nn.sigmoid(cheb(X, Wx[1], bx[1]) + cheb(H, Wh[1], bh[1]))
    Ht = jnp.tanh(cheb(X, Wx[2], bx[2]) + cheb(H * R, Wh[2], bh[2]))
    Hn = Z * H + (1.0 - Z) * Ht
    y = jnp.maximum(Hn, 0.0) @ Wl + bl[0]
    return Hn, y


# ---------------------------------- main ------------------------------------
if __name__ == "__main__":
    key = jax.random.PRNGKey(0)
    ks = jax.random.split(key, 10)

    # deterministic parameters (synthetic init; shapes match the torch module)
    Wx = 0.1 * jax.random.normal(ks[0], (3, K_CHEB, IN_CH, OUT_CH), jnp.float32)
    Wh = 0.1 * jax.random.normal(ks[1], (3, K_CHEB, OUT_CH, OUT_CH), jnp.float32)
    bx = 0.1 * jax.random.normal(ks[2], (3, OUT_CH), jnp.float32)
    bh = 0.1 * jax.random.normal(ks[3], (3, OUT_CH), jnp.float32)
    Wlin = 0.1 * jax.random.normal(ks[4], (OUT_CH, D_D), jnp.float32)
    blin = 0.1 * jax.random.normal(ks[5], (1, D_D), jnp.float32)

    # inputs
    x = jax.random.normal(ks[6], (N_NODES, IN_CH), jnp.float32)
    h0 = jax.random.normal(ks[7], (N_NODES, OUT_CH), jnp.float32)

    # small undirected ring graph with symmetric positive weights
    src = jnp.arange(N_NODES, dtype=jnp.int32)
    dst = (src + 1) % N_NODES
    w = 0.5 + jax.random.uniform(ks[8], (N_NODES,), jnp.float32)
    edge_index = jnp.concatenate(
        [jnp.stack([src, dst]), jnp.stack([dst, src])], axis=1)
    edge_weight = jnp.concatenate([w, w], axis=0)

    L_hat = cheb_scaled_laplacian(edge_index, edge_weight, N_NODES, LAMBDA_MAX)

    h_new, y = tgconvgru_forward(L_hat, x, h0, Wx, bx, Wh, bh, Wlin, blin)
    jax.block_until_ready((h_new, y))

    # sanity check against a pure-JAX reference of the same math
    h_ref, y_ref = ref_forward(L_hat, x, h0, Wx, bx, Wh, bh, Wlin, blin)
    assert jnp.allclose(h_new, h_ref, atol=1e-4, rtol=1e-4), \
        float(jnp.max(jnp.abs(h_new - h_ref)))
    assert jnp.allclose(y, y_ref, atol=1e-4, rtol=1e-4), \
        float(jnp.max(jnp.abs(y - y_ref)))
    assert h_new.shape == (N_NODES, OUT_CH) and y.shape == (N_NODES, D_D)

    print("KERNEL_OK")
</pallas_src>

<mosaic_0001>
module attributes {stable_mosaic.version = 11 : i64} {
  func.func @_tgconvgru_kernel(%arg0: memref<16x16xf32, #tpu.memory_space<vmem>>, %arg1: memref<16x4xf32, #tpu.memory_space<vmem>>, %arg2: memref<16x32xf32, #tpu.memory_space<vmem>>, %arg3: memref<108x128xf32, #tpu.memory_space<vmem>>, %arg4: memref<96x32xf32, #tpu.memory_space<vmem>>, %arg5: memref<1x64xf32, #tpu.memory_space<vmem>>, %arg6: memref<1x32xf32, #tpu.memory_space<vmem>>, %arg7: memref<32x7xf32, #tpu.memory_space<vmem>>, %arg8: memref<1x7xf32, #tpu.memory_space<vmem>>, %arg9: memref<16x32xf32, #tpu.memory_space<vmem>>, %arg10: memref<16x7xf32, #tpu.memory_space<vmem>>) attributes {dimension_semantics = [], scalar_prefetch = 0 : i64, scratch_operands = 0 : i64, tpu.core_type = #tpu.core_type<tc>} {
    %c0 = arith.constant 0 : index
    %c0_0 = arith.constant 0 : index
    %0 = vector.load %arg0[%c0, %c0_0] : memref<16x16xf32, #tpu.memory_space<vmem>>, vector<16x16xf32>
    %c0_1 = arith.constant 0 : index
    %c0_2 = arith.constant 0 : index
    %1 = vector.load %arg1[%c0_1, %c0_2] : memref<16x4xf32, #tpu.memory_space<vmem>>, vector<16x4xf32>
    %c0_3 = arith.constant 0 : index
    %c0_4 = arith.constant 0 : index
    %2 = vector.load %arg2[%c0_3, %c0_4] : memref<16x32xf32, #tpu.memory_space<vmem>>, vector<16x32xf32>
    %3 = tpu.concatenate %1, %2 in 1 : vector<16x4xf32>, vector<16x32xf32> -> vector<16x36xf32>
    %cst = arith.constant dense<0.000000e+00> : vector<16x36xf32>
    %4 = tpu.matmul %0, %3, %cst {dimension_numbers = #tpu.dot_dimension_numbers<[1], [0], [0], [1], [0, 0, 1, 1], [], []>} : vector<16x16xf32>, vector<16x36xf32>, vector<16x36xf32> -> vector<16x36xf32>
    %cst_5 = arith.constant dense<0.000000e+00> : vector<16x36xf32>
    %5 = tpu.matmul %0, %4, %cst_5 {dimension_numbers = #tpu.dot_dimension_numbers<[1], [0], [0], [1], [0, 0, 1, 1], [], []>} : vector<16x16xf32>, vector<16x36xf32>, vector<16x36xf32> -> vector<16x36xf32>
    %cst_6 = arith.constant 2.000000e+00 : f32
    %6 = vector.broadcast %cst_6 : f32 to vector<16x36xf32>
    %7 = arith.mulf %6, %5 : vector<16x36xf32>
    %8 = arith.subf %7, %3 : vector<16x36xf32>
    %9 = tpu.concatenate %3, %4, %8 in 1 : vector<16x36xf32>, vector<16x36xf32>, vector<16x36xf32> -> vector<16x108xf32>
    %c0_7 = arith.constant 0 : index
    %c0_8 = arith.constant 0 : index
    %10 = vector.load %arg3[%c0_7, %c0_8] : memref<108x128xf32, #tpu.memory_space<vmem>>, vector<108x128xf32>
    %cst_9 = arith.constant dense<0.000000e+00> : vector<16x128xf32>
    %11 = tpu.matmul %9, %10, %cst_9 {dimension_numbers = #tpu.dot_dimension_numbers<[1], [0], [0], [1], [0, 0, 1, 1], [], []>} : vector<16x108xf32>, vector<108x128xf32>, vector<16x128xf32> -> vector<16x128xf32>
    %12 = vector.extract_strided_slice %11 {offsets = [0, 0], sizes = [16, 64], strides = [1, 1]} : vector<16x128xf32> to vector<16x64xf32>
    %c0_10 = arith.constant 0 : index
    %c0_11 = arith.constant 0 : index
    %13 = vector.load %arg5[%c0_10, %c0_11] : memref<1x64xf32, #tpu.memory_space<vmem>>, vector<1x64xf32>
    %14 = vector.broadcast %13 : vector<1x64xf32> to vector<16x64xf32>
    %15 = arith.addf %12, %14 : vector<16x64xf32>
    %16 = arith.negf %15 : vector<16x64xf32>
    %17 = math.exp %16 : vector<16x64xf32>
    %cst_12 = arith.constant 1.000000e+00 : f32
    %18 = vector.broadcast %cst_12 : f32 to vector<16x64xf32>
    %19 = arith.addf %18, %17 : vector<16x64xf32>
    %20 = arith.divf %18, %19 : vector<16x64xf32>
    %21 = vector.extract_strided_slice %20 {offsets = [0, 0], sizes = [16, 32], strides = [1, 1]} : vector<16x64xf32> to vector<16x32xf32>
    %22 = vector.extract_strided_slice %20 {offsets = [0, 32], sizes = [16, 32], strides = [1, 1]} : vector<16x64xf32> to vector<16x32xf32>
    %23 = arith.mulf %2, %22 : vector<16x32xf32>
    %cst_13 = arith.constant dense<0.000000e+00> : vector<16x32xf32>
    %24 = tpu.matmul %0, %23, %cst_13 {dimension_numbers = #tpu.dot_dimension_numbers<[1], [0], [0], [1], [0, 0, 1, 1], [], []>} : vector<16x16xf32>, vector<16x32xf32>, vector<16x32xf32> -> vector<16x32xf32>
    %cst_14 = arith.constant dense<0.000000e+00> : vector<16x32xf32>
    %25 = tpu.matmul %0, %24, %cst_14 {dimension_numbers = #tpu.dot_dimension_numbers<[1], [0], [0], [1], [0, 0, 1, 1], [], []>} : vector<16x16xf32>, vector<16x32xf32>, vector<16x32xf32> -> vector<16x32xf32>
    %cst_15 = arith.constant 2.000000e+00 : f32
    %26 = vector.broadcast %cst_15 : f32 to vector<16x32xf32>
    %27 = arith.mulf %26, %25 : vector<16x32xf32>
    %28 = arith.subf %27, %23 : vector<16x32xf32>
    %29 = tpu.concatenate %23, %24, %28 in 1 : vector<16x32xf32>, vector<16x32xf32>, vector<16x32xf32> -> vector<16x96xf32>
    %c0_16 = arith.constant 0 : index
    %c0_17 = arith.constant 0 : index
    %30 = vector.load %arg4[%c0_16, %c0_17] : memref<96x32xf32, #tpu.memory_space<vmem>>, vector<96x32xf32>
    %cst_18 = arith.constant dense<0.000000e+00> : vector<16x32xf32>
    %31 = tpu.matmul %29, %30, %cst_18 {dimension_numbers = #tpu.dot_dimension_numbers<[1], [0], [0], [1], [0, 0, 1, 1], [], []>} : vector<16x96xf32>, vector<96x32xf32>, vector<16x32xf32> -> vector<16x32xf32>
    %32 = vector.extract_strided_slice %11 {offsets = [0, 64], sizes = [16, 32], strides = [1, 1]} : vector<16x128xf32> to vector<16x32xf32>
    %33 = arith.addf %32, %31 : vector<16x32xf32>
    %c0_19 = arith.constant 0 : index
    %c0_20 = arith.constant 0 : index
    %34 = vector.load %arg6[%c0_19, %c0_20] : memref<1x32xf32, #tpu.memory_space<vmem>>, vector<1x32xf32>
    %35 = vector.broadcast %34 : vector<1x32xf32> to vector<16x32xf32>
    %36 = arith.addf %33, %35 : vector<16x32xf32>
    %37 = math.tanh %36 : vector<16x32xf32>
    %38 = arith.mulf %21, %2 : vector<16x32xf32>
    %cst_21 = arith.constant 1.000000e+00 : f32
    %39 = vector.broadcast %cst_21 : f32 to vector<16x32xf32>
    %40 = arith.subf %39, %21 : vector<16x32xf32>
    %41 = arith.mulf %40, %37 : vector<16x32xf32>
    %42 = arith.addf %38, %41 : vector<16x32xf32>
    %c0_22 = arith.constant 0 : index
    %c0_23 = arith.constant 0 : index
    %43 = vector.load %arg9[%c0_22, %c0_23] : memref<16x32xf32, #tpu.memory_space<vmem>>, vector<16x32xf32>
    tpu.vector_store %arg9[%c0_22, %c0_23], %42 {strides = array<i32>} : memref<16x32xf32, #tpu.memory_space<vmem>>, vector<16x32xf32>,
    %cst_24 = arith.constant 0.000000e+00 : f32
    %44 = vector.broadcast %cst_24 : f32 to vector<16x32xf32>
    %45 = arith.maximumf %42, %44 : vector<16x32xf32>
    %c0_25 = arith.constant 0 : index
    %c0_26 = arith.constant 0 : index
    %46 = vector.load %arg7[%c0_25, %c0_26] : memref<32x7xf32, #tpu.memory_space<vmem>>, vector<32x7xf32>
    %cst_27 = arith.constant dense<0.000000e+00> : vector<16x7xf32>
    %47 = tpu.matmul %45, %46, %cst_27 {dimension_numbers = #tpu.dot_dimension_numbers<[1], [0], [0], [1], [0, 0, 1, 1], [], []>} : vector<16x32xf32>, vector<32x7xf32>, vector<16x7xf32> -> vector<16x7xf32>
    %c0_28 = arith.constant 0 : index
    %c0_29 = arith.constant 0 : index
    %48 = vector.load %arg8[%c0_28, %c0_29] : memref<1x7xf32, #tpu.memory_space<vmem>>, vector<1x7xf32>
    %49 = vector.broadcast %48 : vector<1x7xf32> to vector<16x7xf32>
    %50 = arith.addf %47, %49 : vector<16x7xf32>
    %c0_30 = arith.constant 0 : index
    %c0_31 = arith.constant 0 : index
    %51 = vector.load %arg10[%c0_30, %c0_31] : memref<16x7xf32, #tpu.memory_space<vmem>>, vector<16x7xf32>
    tpu.vector_store %arg10[%c0_30, %c0_31], %50 {strides = array<i32>} : memref<16x7xf32, #tpu.memory_space<vmem>>, vector<16x7xf32>,
    return
  }
}

</mosaic_0001>

<llo_original>
// kernel: _tgconvgru_forward.1
$region0: #{_tgconvgru_forward.1}
  #allocation0 [shape = 'u32[]', space=smem, size = 0x4, offset = 0x4, fixed_abs, tag = 'smem constant byte address 0x4 - core index']
  #allocation1 [shape = 'u32[144,128]{1,0:T(1,128)}', space=vmem, size = 0x12000, scoped, tag = 'internal scratch']
  %s0 = inlined_call_operand.vmem [shape: f32[16,16], index: 0, kind: input, shape index: {}]
  %s1 = inlined_call_operand.vmem [shape: f32[16,4], index: 1, kind: input, shape index: {}]
  %s2 = inlined_call_operand.vmem [shape: f32[16,32], index: 2, kind: input, shape index: {}]
  %s3 = inlined_call_operand.vmem [shape: f32[108,128], index: 3, kind: input, shape index: {}]
  %s4 = inlined_call_operand.vmem [shape: f32[96,32], index: 4, kind: input, shape index: {}]
  %s5 = inlined_call_operand.vmem [shape: f32[1,64], index: 5, kind: input, shape index: {}]
  %s6 = inlined_call_operand.vmem [shape: f32[1,32], index: 6, kind: input, shape index: {}]
  %s7 = inlined_call_operand.vmem [shape: f32[32,7], index: 7, kind: input, shape index: {}]
  %s8 = inlined_call_operand.vmem [shape: f32[1,7], index: 8, kind: input, shape index: {}]
  %s9 = inlined_call_operand.hbm [shape: f32[16,32], index: 9, kind: output, shape index: {0}]
  %s10 = inlined_call_operand.vmem [shape: f32[16,7], index: 10, kind: output, shape index: {1}]
  %11 = xla_tuple %s9, %s10
  %s12 = sld [smem:[#allocation0]]
  $region54: #{_tgconvgru_forward.1} parent=0
    _
  %s14 = ssub.s32 1, %s12
  %s15 = scalar_select 0, %s14, %s12
  $region1: #{_tgconvgru_forward.1} parent=0
    #allocation2 [shape = 'u8[8192]{0}', space=vmem, size = 0x2000, scoped, tag = 'output window, operand 0, single buffered']
    #allocation3 [shape = 's32[1]{0}', space=sflag, size = 0x4, scoped, tag = 'scoped memory for _tgconvgru_forward.1']
    %16 = vsyncpa [#allocation3], 0
    // Predicated region
    $region2: #{_tgconvgru_forward.1} parent=1 // pred_check
      _
    $region3: #{_tgconvgru_forward.1} parent=1 // pred_check_branch
      %18 = sbr.rel (0) target = $region5
    $region4: #{_tgconvgru_forward.1} parent=1 // pred_region
      _
    $region5: #{_tgconvgru_forward.1} parent=1 // pred_fallthru
      _
    // Predicated region
    $region6: #{_tgconvgru_forward.1} parent=1 // pred_check
      _
    $region7: #{_tgconvgru_forward.1} parent=1 // pred_check_branch
      %20 = sbr.rel (0) target = $region9
    $region8: #{_tgconvgru_forward.1} parent=1 // pred_region
      _
    $region9: #{_tgconvgru_forward.1} parent=1 // pred_fallthru
      _
    // Predicated region
    $region10: #{_tgconvgru_forward.1} parent=1 // pred_check
      _
    $region11: #{_tgconvgru_forward.1} parent=1 // pred_check_branch
      %22 = sbr.rel (0) target = $region13
    $region12: #{_tgconvgru_forward.1} parent=1 // pred_region
      _
    $region13: #{_tgconvgru_forward.1} parent=1 // pred_fallthru
      _
    // Predicated region
    $region14: #{_tgconvgru_forward.1} parent=1 // pred_check
      _
    $region15: #{_tgconvgru_forward.1} parent=1 // pred_check_branch
      %24 = sbr.rel (0) target = $region17
    $region16: #{_tgconvgru_forward.1} parent=1 // pred_region
      _
    $region17: #{_tgconvgru_forward.1} parent=1 // pred_fallthru
      _
    // Predicated region
    $region18: #{_tgconvgru_forward.1} parent=1 // pred_check
      _
    $region19: #{_tgconvgru_forward.1} parent=1 // pred_check_branch
      %26 = sbr.rel (0) target = $region21
    $region20: #{_tgconvgru_forward.1} parent=1 // pred_region
      _
    $region21: #{_tgconvgru_forward.1} parent=1 // pred_fallthru
      _
    // Predicated region
    $region22: #{_tgconvgru_forward.1} parent=1 // pred_check
      _
    $region23: #{_tgconvgru_forward.1} parent=1 // pred_check_branch
      %28 = sbr.rel (0) target = $region25
    $region24: #{_tgconvgru_forward.1} parent=1 // pred_region
      _
    $region25: #{_tgconvgru_forward.1} parent=1 // pred_fallthru
      _
    // Predicated region
    $region26: #{_tgconvgru_forward.1} parent=1 // pred_check
      _
    $region27: #{_tgconvgru_forward.1} parent=1 // pred_check_branch
      %30 = sbr.rel (0) target = $region29
    $region28: #{_tgconvgru_forward.1} parent=1 // pred_region
      _
    $region29: #{_tgconvgru_forward.1} parent=1 // pred_fallthru
      _
    // Predicated region
    $region30: #{_tgconvgru_forward.1} parent=1 // pred_check
      _
    $region31: #{_tgconvgru_forward.1} parent=1 // pred_check_branch
      %32 = sbr.rel (0) target = $region33
    $region32: #{_tgconvgru_forward.1} parent=1 // pred_region
      _
    $region33: #{_tgconvgru_forward.1} parent=1 // pred_fallthru
      _
    // Predicated region
    $region34: #{_tgconvgru_forward.1} parent=1 // pred_check
      _
    $region35: #{_tgconvgru_forward.1} parent=1 // pred_check_branch
      %34 = sbr.rel (0) target = $region37
    $region36: #{_tgconvgru_forward.1} parent=1 // pred_region
      _
    $region37: #{_tgconvgru_forward.1} parent=1 // pred_fallthru
      _
    %v35 = vld [vmem:[%s0] sm:$0xff]
    %v36 = vld [vmem:[%s0 + $0x8] sm:$0xff]
    %v37 = vld [vmem:[%s1] sm:$0xff]
    %v38 = vld [vmem:[%s1 + $0x8] sm:$0xff]
    %v39 = vld [vmem:[%s2] sm:$0xff]
    %v40 = vld [vmem:[%s2 + $0x8] sm:$0xff]
    %43 = vrot.lane.b32.xlu0 %v39, 4
    %v44 = vpop.permute.xlu0 %43
    %45 = vrot.lane.b32.xlu0 %v40, 4
    %v46 = vpop.permute.xlu0 %45
    %vm49 = vcmask 31744
    %v50 = vsel %vm49, %v37, %v44
    %v51 = vsel %vm49, %v38, %v46
    %vm52 = vcmask 130048
    %v54 = vsel %vm52, %v35, 0
    %v57 = vsel %vm52, %v36, 0
    %59 = vmatprep.subr.mxu0 0.0
    %60 = vmatpush1.msra.mxu0 %v50
    %61 = vmatprep.subr.mxu0 0.0
    %62 = vmatpush1.msra.mxu0 %v51
    %63 = vmatprep.subr.mxu0 0.0
    %64 = vmatpush1.msra.mxu0 0.0
    %65 = vmatprep.subr.mxu0 0.0
    %66 = vmatpush1.msra.mxu0 0.0
    %67 = vmatprep.subr.mxu0 0.0
    %68 = vmatpush1.msra.mxu0 0.0
    %69 = vmatprep.subr.mxu0 0.0
    %70 = vmatpush1.msra.mxu0 0.0
    %71 = vmatprep.subr.mxu0 0.0
    %72 = vmatpush1.msra.mxu0 0.0
    %73 = vmatprep.subr.mxu0 0.0
    %74 = vmatpush1.msra.mxu0 0.0
    %75 = vmatprep.subr.mxu0 0.0
    %76 = vmatpush1.msra.mxu0 0.0
    %77 = vmatprep.subr.mxu0 0.0
    %78 = vmatpush1.msra.mxu0 0.0
    %79 = vmatprep.subr.mxu0 0.0
    %80 = vmatpush1.msra.mxu0 0.0
    %81 = vmatprep.subr.mxu0 0.0
    %82 = vmatpush1.msra.mxu0 0.0
    %83 = vmatprep.subr.mxu0 0.0
    %84 = vmatpush1.msra.mxu0 0.0
    %85 = vmatprep.subr.mxu0 0.0
    %86 = vmatpush1.msra.mxu0 0.0
    %87 = vmatprep.subr.mxu0 0.0
    %88 = vmatpush1.msra.mxu0 0.0
    %89 = vmatprep.subr.mxu0 0.0
    %90 = vmatpush1.msra.mxu0 0.0
    %91 = vmatprep.subr.mxu0 0.0
    %92 = vmatpush1.msra.mxu0 0.0
    %93 = vmatprep.subr.mxu0 0.0
    %94 = vmatpush1.msra.mxu0 0.0
    %95 = vmatprep.subr.mxu0 0.0
    %96 = vmatpush1.msra.mxu0 0.0
    %97 = vmatprep.subr.mxu0 0.0
    %98 = vmatpush1.msra.mxu0 0.0
    %99 = vmatprep.subr.mxu0 0.0
    %100 = vmatpush1.msra.mxu0 0.0
    %101 = vmatprep.subr.mxu0 0.0
    %102 = vmatpush1.msra.mxu0 0.0
    %103 = vmatprep.subr.mxu0 0.0
    %104 = vmatpush1.msra.mxu0 0.0
    %105 = vmatprep.subr.mxu0 0.0
    %106 = vmatpush1.msra.mxu0 0.0
    %107 = vmatprep.subr.mxu0 0.0
    %108 = vmatpush1.msra.mxu0 0.0
    %109 = vmatprep.subr.mxu0 0.0
    %110 = vmatpush1.msra.mxu0 0.0
    %111 = vmatprep.subr.mxu0 0.0
    %112 = vmatpush1.msra.mxu0 0.0
    %113 = vmatprep.subr.mxu0 0.0
    %114 = vmatpush1.msra.mxu0 0.0
    %115 = vmatprep.subr.mxu0 0.0
    %116 = vmatpush1.msra.mxu0 0.0
    %117 = vmatprep.subr.mxu0 0.0
    %118 = vmatpush1.msra.mxu0 0.0
    %119 = vmatprep.subr.mxu0 0.0
    %120 = vmatpush1.msra.mxu0 0.0
    %121 = vmatprep.subr.mxu0 0.0
    %122 = vmatpush1.msra.mxu0 0.0
    %123 = vmatprep.mubr.f32.mxu0 0.0
    %124 = vmatmul.mubr.f32.gmra.mrb[0].mxu0 %v54
    %v125 = vpop.f32.mrb[0].mxu0
    %v126 = vadd.f32 0.0, %v125
    %v127 = vpop.f32.mrb[0].mxu0
    %128 = vmatprep.mubr.f32.mxu0 0.0
    %129 = vmatmul.mubr.f32.gmra.mrb[0].mxu0 %v57
    %v130 = vpop.f32.mrb[0].mxu0
    %v131 = vadd.f32 0.0, %v130
    %v132 = vpop.f32.mrb[0].mxu0
    %133 = vdwg.mxu0
    %134 = vmatprep.subr.mxu0 0.0
    %135 = vmatpush1.msra.mxu0 %v126
    %136 = vmatprep.subr.mxu0 0.0
    %137 = vmatpush1.msra.mxu0 %v131
    %138 = vmatprep.subr.mxu0 0.0
    %139 = vmatpush1.msra.mxu0 0.0
    %140 = vmatprep.subr.mxu0 0.0
    %141 = vmatpush1.msra.mxu0 0.0
    %142 = vmatprep.subr.mxu0 0.0
    %143 = vmatpush1.msra.mxu0 0.0
    %144 = vmatprep.subr.mxu0 0.0
    %145 = vmatpush1.msra.mxu0 0.0
    %146 = vmatprep.subr.mxu0 0.0
    %147 = vmatpush1.msra.mxu0 0.0
    %148 = vmatprep.subr.mxu0 0.0
    %149 = vmatpush1.msra.mxu0 0.0
    %150 = vmatprep.subr.mxu0 0.0
    %151 = vmatpush1.msra.mxu0 0.0
    %152 = vmatprep.subr.mxu0 0.0
    %153 = vmatpush1.msra.mxu0 0.0
    %154 = vmatprep.subr.mxu0 0.0
    %155 = vmatpush1.msra.mxu0 0.0
    %156 = vmatprep.subr.mxu0 0.0
    %157 = vmatpush1.msra.mxu0 0.0
    %158 = vmatprep.subr.mxu0 0.0
    %159 = vmatpush1.msra.mxu0 0.0
    %160 = vmatprep.subr.mxu0 0.0
    %161 = vmatpush1.msra.mxu0 0.0
    %162 = vmatprep.subr.mxu0 0.0
    %163 = vmatpush1.msra.mxu0 0.0
    %164 = vmatprep.subr.mxu0 0.0
    %165 = vmatpush1.msra.mxu0 0.0
    %166 = vmatprep.subr.mxu0 0.0
    %167 = vmatpush1.msra.mxu0 0.0
    %168 = vmatprep.subr.mxu0 0.0
    %169 = vmatpush1.msra.mxu0 0.0
    %170 = vmatprep.subr.mxu0 0.0
    %171 = vmatpush1.msra.mxu0 0.0
    %172 = vmatprep.subr.mxu0 0.0
    %173 = vmatpush1.msra.mxu0 0.0
    %174 = vmatprep.subr.mxu0 0.0
    %175 = vmatpush1.msra.mxu0 0.0
    %176 = vmatprep.subr.mxu0 0.0
    %177 = vmatpush1.msra.mxu0 0.0
    %178 = vmatprep.subr.mxu0 0.0
    %179 = vmatpush1.msra.mxu0 0.0
    %180 = vmatprep.subr.mxu0 0.0
    %181 = vmatpush1.msra.mxu0 0.0
    %182 = vmatprep.subr.mxu0 0.0
    %183 = vmatpush1.msra.mxu0 0.0
    %184 = vmatprep.subr.mxu0 0.0
    %185 = vmatpush1.msra.mxu0 0.0
    %186 = vmatprep.subr.mxu0 0.0
    %187 = vmatpush1.msra.mxu0 0.0
    %188 = vmatprep.subr.mxu0 0.0
    %189 = vmatpush1.msra.mxu0 0.0
    %190 = vmatprep.subr.mxu0 0.0
    %191 = vmatpush1.msra.mxu0 0.0
    %192 = vmatprep.subr.mxu0 0.0
    %193 = vmatpush1.msra.mxu0 0.0
    %194 = vmatprep.subr.mxu0 0.0
    %195 = vmatpush1.msra.mxu0 0.0
    %196 = vmatprep.subr.mxu0 0.0
    %197 = vmatpush1.msra.mxu0 0.0
    %198 = vmatprep.mubr.f32.mxu0 0.0
    %199 = vmatmul.mubr.f32.gmra.mrb[0].mxu0 %v54
    %v200 = vpop.f32.mrb[0].mxu0
    %v201 = vadd.f32 0.0, %v200
    %v202 = vpop.f32.mrb[0].mxu0
    %203 = vmatprep.mubr.f32.mxu0 0.0
    %204 = vmatmul.mubr.f32.gmra.mrb[0].mxu0 %v57
    %v205 = vpop.f32.mrb[0].mxu0
    %v206 = vadd.f32 0.0, %v205
    %v207 = vpop.f32.mrb[0].mxu0
    %208 = vdwg.mxu0
    %v209 = vmul.f32 %v201, 2.0
    %v210 = vmul.f32 %v206, 2.0
    %v211 = vsub.f32 %v209, %v50
    %v212 = vsub.f32 %v210, %v51
    %215 = vrot.lane.b32.xlu0 %v126, 36
    %v216 = vpop.permute.xlu0 %215
    %217 = vrot.lane.b32.xlu0 %v131, 36
    %v218 = vpop.permute.xlu0 %217
    %223 = vrot.lane.b32.xlu0 %v211, 72
    %v224 = vpop.permute.xlu0 %223
    %225 = vrot.lane.b32.xlu0 %v212, 72
    %v226 = vpop.permute.xlu0 %225
    %vm229 = vcmask 293888
    %v230 = vsel %vm229, %v50, %v216
    %v231 = vsel %vm229, %v51, %v218
    %vm232 = vcmask 588800
    %v233 = vsel %vm232, %v230, %v224
    %v234 = vsel %vm232, %v231, %v226
    %v235 = vld [vmem:[%s3] sm:$0xff]
    %v236 = vld [vmem:[%s3 + $0x8] sm:$0xff]
    %v237 = vld [vmem:[%s3 + $0x10] sm:$0xff]
    %v238 = vld [vmem:[%s3 + $0x18] sm:$0xff]
    %v239 = vld [vmem:[%s3 + $0x20] sm:$0xff]
    %v240 = vld [vmem:[%s3 + $0x28] sm:$0xff]
    %v241 = vld [vmem:[%s3 + $0x30] sm:$0xff]
    %v242 = vld [vmem:[%s3 + $0x38] sm:$0xff]
    %v243 = vld [vmem:[%s3 + $0x40] sm:$0xff]
    %v244 = vld [vmem:[%s3 + $0x48] sm:$0xff]
    %v245 = vld [vmem:[%s3 + $0x50] sm:$0xff]
    %v246 = vld [vmem:[%s3 + $0x58] sm:$0xff]
    %v247 = vld [vmem:[%s3 + $0x60] sm:$0xff]
    %v248 = vld [vmem:[%s3 + $0x68] sm:$0xf]
    %vm249 = vcmask 883712
    %v251 = vsel %vm249, %v233, 0
    %v254 = vsel %vm249, %v234, 0
    %vm256 = vcmask 1043456
    %v258 = vsel %vm256, %v248, 0
    %260 = vmatprep.subr.mxu0 0.0
    %261 = vmatpush1.msra.mxu0 %v235
    %262 = vmatprep.subr.mxu0 0.0
    %263 = vmatpush1.msra.mxu0 %v236
    %264 = vmatprep.subr.mxu0 0.0
    %265 = vmatpush1.msra.mxu0 %v237
    %266 = vmatprep.subr.mxu0 0.0
    %267 = vmatpush1.msra.mxu0 %v238
    %268 = vmatprep.subr.mxu0 0.0
    %269 = vmatpush1.msra.mxu0 %v239
    %270 = vmatprep.subr.mxu0 0.0
    %271 = vmatpush1.msra.mxu0 %v240
    %272 = vmatprep.subr.mxu0 0.0
    %273 = vmatpush1.msra.mxu0 %v241
    %274 = vmatprep.subr.mxu0 0.0
    %275 = vmatpush1.msra.mxu0 %v242
    %276 = vmatprep.subr.mxu0 0.0
    %277 = vmatpush1.msra.mxu0 %v243
    %278 = vmatprep.subr.mxu0 0.0
    %279 = vmatpush1.msra.mxu0 %v244
    %280 = vmatprep.subr.mxu0 0.0
    %281 = vmatpush1.msra.mxu0 %v245
    %282 = vmatprep.subr.mxu0 0.0
    %283 = vmatpush1.msra.mxu0 %v246
    %284 = vmatprep.subr.mxu0 0.0
    %285 = vmatpush1.msra.mxu0 %v247
    %286 = vmatprep.subr.mxu0 0.0
    %287 = vmatpush1.msra.mxu0 %v258
    %288 = vmatprep.subr.mxu0 0.0
    %289 = vmatpush1.msra.mxu0 0.0
    %290 = vmatprep.subr.mxu0 0.0
    %291 = vmatpush1.msra.mxu0 0.0
    %292 = vmatprep.subr.mxu0 0.0
    %293 = vmatpush1.msra.mxu0 0.0
    %294 = vmatprep.subr.mxu0 0.0
    %295 = vmatpush1.msra.mxu0 0.0
    %296 = vmatprep.subr.mxu0 0.0
    %297 = vmatpush1.msra.mxu0 0.0
    %298 = vmatprep.subr.mxu0 0.0
    %299 = vmatpush1.msra.mxu0 0.0
    %300 = vmatprep.subr.mxu0 0.0
    %301 = vmatpush1.msra.mxu0 0.0
    %302 = vmatprep.subr.mxu0 0.0
    %303 = vmatpush1.msra.mxu0 0.0
    %304 = vmatprep.subr.mxu0 0.0
    %305 = vmatpush1.msra.mxu0 0.0
    %306 = vmatprep.subr.mxu0 0.0
    %307 = vmatpush1.msra.mxu0 0.0
    %308 = vmatprep.subr.mxu0 0.0
    %309 = vmatpush1.msra.mxu0 0.0
    %310 = vmatprep.subr.mxu0 0.0
    %311 = vmatpush1.msra.mxu0 0.0
    %312 = vmatprep.subr.mxu0 0.0
    %313 = vmatpush1.msra.mxu0 0.0
    %314 = vmatprep.subr.mxu0 0.0
    %315 = vmatpush1.msra.mxu0 0.0
    %316 = vmatprep.subr.mxu0 0.0
    %317 = vmatpush1.msra.mxu0 0.0
    %318 = vmatprep.subr.mxu0 0.0
    %319 = vmatpush1.msra.mxu0 0.0
    %320 = vmatprep.subr.mxu0 0.0
    %321 = vmatpush1.msra.mxu0 0.0
    %322 = vmatprep.subr.mxu0 0.0
    %323 = vmatpush1.msra.mxu0 0.0
    %324 = vmatprep.mubr.f32.mxu0 0.0
    %325 = vmatmul.mubr.f32.gmra.mrb[0].mxu0 %v251
    %v326 = vpop.f32.mrb[0].mxu0
    %v327 = vadd.f32 0.0, %v326
    %v328 = vpop.f32.mrb[0].mxu0
    %329 = vmatprep.mubr.f32.mxu0 0.0
    %330 = vmatmul.mubr.f32.gmra.mrb[0].mxu0 %v254
    %v331 = vpop.f32.mrb[0].mxu0
    %v332 = vadd.f32 0.0, %v331
    %v333 = vpop.f32.mrb[0].mxu0
    %334 = vdwg.mxu0
    %v335 = vld [vmem:[%s5] sm:$0x1]
    %v337 = vlaneseq
    %v338 = vshrl.u32 %v337, 7
    %v339 = vsub.s32 0, %v338
    %v340 = vrot.slane %v335, %v339
    %v342 = vadd.f32 %v327, %v340
    %v343 = vadd.f32 %v332, %v340
    %v344 = vxor.u32 %v342, 2147483648
    %v345 = vxor.u32 %v343, 2147483648
    %v346 = vmul.f32 %v344, 1.442695
    %v347 = vpow.pop %v346
    %v348 = vmul.f32 %v345, 1.442695
    %v349 = vpow.pop %v348
    %v350 = vadd.f32 %v347, 1.0
    %v351 = vadd.f32 %v349, 1.0
    %v352 = vrcp.pop %v350
    %v353 = vmul.f32 1.0, %v352
    %v354 = vrcp.pop %v351
    %v355 = vmul.f32 1.0, %v354
    %358 = vrot.lane.b32.xlu0 %v353, 96
    %v359 = vpop.permute.xlu0 %358
    %360 = vrot.lane.b32.xlu0 %v355, 96
    %v361 = vpop.permute.xlu0 %360
    %v364 = vmul.f32 %v39, %v359
    %v365 = vmul.f32 %v40, %v361
    %366 = vmatprep.subr.mxu0 0.0
    %367 = vmatpush1.msra.mxu0 %v364
    %368 = vmatprep.subr.mxu0 0.0
    %369 = vmatpush1.msra.mxu0 %v365
    %370 = vmatprep.subr.mxu0 0.0
    %371 = vmatpush1.msra.mxu0 0.0
    %372 = vmatprep.subr.mxu0 0.0
    %373 = vmatpush1.msra.mxu0 0.0
    %374 = vmatprep.subr.mxu0 0.0
    %375 = vmatpush1.msra.mxu0 0.0
    %376 = vmatprep.subr.mxu0 0.0
    %377 = vmatpush1.msra.mxu0 0.0
    %378 = vmatprep.subr.mxu0 0.0
    %379 = vmatpush1.msra.mxu0 0.0
    %380 = vmatprep.subr.mxu0 0.0
    %381 = vmatpush1.msra.mxu0 0.0
    %382 = vmatprep.subr.mxu0 0.0
    %383 = vmatpush1.msra.mxu0 0.0
    %384 = vmatprep.subr.mxu0 0.0
    %385 = vmatpush1.msra.mxu0 0.0
    %386 = vmatprep.subr.mxu0 0.0
    %387 = vmatpush1.msra.mxu0 0.0
    %388 = vmatprep.subr.mxu0 0.0
    %389 = vmatpush1.msra.mxu0 0.0
    %390 = vmatprep.subr.mxu0 0.0
    %391 = vmatpush1.msra.mxu0 0.0
    %392 = vmatprep.subr.mxu0 0.0
    %393 = vmatpush1.msra.mxu0 0.0
    %394 = vmatprep.subr.mxu0 0.0
    %395 = vmatpush1.msra.mxu0 0.0
    %396 = vmatprep.subr.mxu0 0.0
    %397 = vmatpush1.msra.mxu0 0.0
    %398 = vmatprep.subr.mxu0 0.0
    %399 = vmatpush1.msra.mxu0 0.0
    %400 = vmatprep.subr.mxu0 0.0
    %401 = vmatpush1.msra.mxu0 0.0
    %402 = vmatprep.subr.mxu0 0.0
    %403 = vmatpush1.msra.mxu0 0.0
    %404 = vmatprep.subr.mxu0 0.0
    %405 = vmatpush1.msra.mxu0 0.0
    %406 = vmatprep.subr.mxu0 0.0
    %407 = vmatpush1.msra.mxu0 0.0
    %408 = vmatprep.subr.mxu0 0.0
    %409 = vmatpush1.msra.mxu0 0.0
    %410 = vmatprep.subr.mxu0 0.0
    %411 = vmatpush1.msra.mxu0 0.0
    %412 = vmatprep.subr.mxu0 0.0
    %413 = vmatpush1.msra.mxu0 0.0
    %414 = vmatprep.subr.mxu0 0.0
    %415 = vmatpush1.msra.mxu0 0.0
    %416 = vmatprep.subr.mxu0 0.0
    %417 = vmatpush1.msra.mxu0 0.0
    %418 = vmatprep.subr.mxu0 0.0
    %419 = vmatpush1.msra.mxu0 0.0
    %420 = vmatprep.subr.mxu0 0.0
    %421 = vmatpush1.msra.mxu0 0.0
    %422 = vmatprep.subr.mxu0 0.0
    %423 = vmatpush1.msra.mxu0 0.0
    %424 = vmatprep.subr.mxu0 0.0
    %425 = vmatpush1.msra.mxu0 0.0
    %426 = vmatprep.subr.mxu0 0.0
    %427 = vmatpush1.msra.mxu0 0.0
    %428 = vmatprep.subr.mxu0 0.0
    %429 = vmatpush1.msra.mxu0 0.0
    %430 = vmatprep.mubr.f32.mxu0 0.0
    %431 = vmatmul.mubr.f32.gmra.mrb[0].mxu0 %v54
    %v432 = vpop.f32.mrb[0].mxu0
    %v433 = vadd.f32 0.0, %v432
    %v434 = vpop.f32.mrb[0].mxu0
    %435 = vmatprep.mubr.f32.mxu0 0.0
    %436 = vmatmul.mubr.f32.gmra.mrb[0].mxu0 %v57
    %v437 = vpop.f32.mrb[0].mxu0
    %v438 = vadd.f32 0.0, %v437
    %v439 = vpop.f32.mrb[0].mxu0
    %440 = vdwg.mxu0
    %441 = vmatprep.subr.mxu0 0.0
    %442 = vmatpush1.msra.mxu0 %v433
    %443 = vmatprep.subr.mxu0 0.0
    %444 = vmatpush1.msra.mxu0 %v438
    %445 = vmatprep.subr.mxu0 0.0
    %446 = vmatpush1.msra.mxu0 0.0
    %447 = vmatprep.subr.mxu0 0.0
    %448 = vmatpush1.msra.mxu0 0.0
    %449 = vmatprep.subr.mxu0 0.0
    %450 = vmatpush1.msra.mxu0 0.0
    %451 = vmatprep.subr.mxu0 0.0
    %452 = vmatpush1.msra.mxu0 0.0
    %453 = vmatprep.subr.mxu0 0.0
    %454 = vmatpush1.msra.mxu0 0.0
    %455 = vmatprep.subr.mxu0 0.0
    %456 = vmatpush1.msra.mxu0 0.0
    %457 = vmatprep.subr.mxu0 0.0
    %458 = vmatpush1.msra.mxu0 0.0
    %459 = vmatprep.subr.mxu0 0.0
    %460 = vmatpush1.msra.mxu0 0.0
    %461 = vmatprep.subr.mxu0 0.0
    %462 = vmatpush1.msra.mxu0 0.0
    %463 = vmatprep.subr.mxu0 0.0
    %464 = vmatpush1.msra.mxu0 0.0
    %465 = vmatprep.subr.mxu0 0.0
    %466 = vmatpush1.msra.mxu0 0.0
    %467 = vmatprep.subr.mxu0 0.0
    %468 = vmatpush1.msra.mxu0 0.0
    %469 = vmatprep.subr.mxu0 0.0
    %470 = vmatpush1.msra.mxu0 0.0
    %471 = vmatprep.subr.mxu0 0.0
    %472 = vmatpush1.msra.mxu0 0.0
    %473 = vmatprep.subr.mxu0 0.0
    %474 = vmatpush1.msra.mxu0 0.0
    %475 = vmatprep.subr.mxu0 0.0
    %476 = vmatpush1.msra.mxu0 0.0
    %477 = vmatprep.subr.mxu0 0.0
    %478 = vmatpush1.msra.mxu0 0.0
    %479 = vmatprep.subr.mxu0 0.0
    %480 = vmatpush1.msra.mxu0 0.0
    %481 = vmatprep.subr.mxu0 0.0
    %482 = vmatpush1.msra.mxu0 0.0
    %483 = vmatprep.subr.mxu0 0.0
    %484 = vmatpush1.msra.mxu0 0.0
    %485 = vmatprep.subr.mxu0 0.0
    %486 = vmatpush1.msra.mxu0 0.0
    %487 = vmatprep.subr.mxu0 0.0
    %488 = vmatpush1.msra.mxu0 0.0
    %489 = vmatprep.subr.mxu0 0.0
    %490 = vmatpush1.msra.mxu0 0.0
    %491 = vmatprep.subr.mxu0 0.0
    %492 = vmatpush1.msra.mxu0 0.0
    %493 = vmatprep.subr.mxu0 0.0
    %494 = vmatpush1.msra.mxu0 0.0
    %495 = vmatprep.subr.mxu0 0.0
    %496 = vmatpush1.msra.mxu0 0.0
    %497 = vmatprep.subr.mxu0 0.0
    %498 = vmatpush1.msra.mxu0 0.0
    %499 = vmatprep.subr.mxu0 0.0
    %500 = vmatpush1.msra.mxu0 0.0
    %501 = vmatprep.subr.mxu0 0.0
    %502 = vmatpush1.msra.mxu0 0.0
    %503 = vmatprep.subr.mxu0 0.0
    %504 = vmatpush1.msra.mxu0 0.0
    %505 = vmatprep.mubr.f32.mxu0 0.0
    %506 = vmatmul.mubr.f32.gmra.mrb[0].mxu0 %v54
    %v507 = vpop.f32.mrb[0].mxu0
    %v508 = vadd.f32 0.0, %v507
    %v509 = vpop.f32.mrb[0].mxu0
    %510 = vmatprep.mubr.f32.mxu0 0.0
    %511 = vmatmul.mubr.f32.gmra.mrb[0].mxu0 %v57
    %v512 = vpop.f32.mrb[0].mxu0
    %v513 = vadd.f32 0.0, %v512
    %v514 = vpop.f32.mrb[0].mxu0
    %515 = vdwg.mxu0
    %v516 = vmul.f32 %v508, 2.0
    %v517 = vmul.f32 %v513, 2.0
    %v518 = vsub.f32 %v516, %v364
    %v519 = vsub.f32 %v517, %v365
    %522 = vrot.lane.b32.xlu0 %v433, 32
    %v523 = vpop.permute.xlu0 %522
    %524 = vrot.lane.b32.xlu0 %v438, 32
    %v525 = vpop.permute.xlu0 %524
    %530 = vrot.lane.b32.xlu0 %v518, 64
    %v531 = vpop.permute.xlu0 %530
    %532 = vrot.lane.b32.xlu0 %v519, 64
    %v533 = vpop.permute.xlu0 %532
    %vm536 = vcmask 261120
    %v537 = vsel %vm536, %v364, %v523
    %v538 = vsel %vm536, %v365, %v525
    %vm539 = vcmask 523264
    %v540 = vsel %vm539, %v537, %v531
    %v541 = vsel %vm539, %v538, %v533
    %v542 = vld [vmem:[%s4] sm:$0xff]
    %v543 = vld [vmem:[%s4 + $0x8] sm:$0xff]
    %v544 = vld [vmem:[%s4 + $0x10] sm:$0xff]
    %v545 = vld [vmem:[%s4 + $0x18] sm:$0xff]
    %v546 = vld [vmem:[%s4 + $0x20] sm:$0xff]
    %v547 = vld [vmem:[%s4 + $0x28] sm:$0xff]
    %v548 = vld [vmem:[%s4 + $0x30] sm:$0xff]
    %v549 = vld [vmem:[%s4 + $0x38] sm:$0xff]
    %v550 = vld [vmem:[%s4 + $0x40] sm:$0xff]
    %v551 = vld [vmem:[%s4 + $0x48] sm:$0xff]
    %v552 = vld [vmem:[%s4 + $0x50] sm:$0xff]
    %v553 = vld [vmem:[%s4 + $0x58] sm:$0xff]
    %vm554 = vcmask 785408
    %v556 = vsel %vm554, %v540, 0
    %v559 = vsel %vm554, %v541, 0
    %561 = vmatprep.subr.mxu0 0.0
    %562 = vmatpush1.msra.mxu0 %v542
    %563 = vmatprep.subr.mxu0 0.0
    %564 = vmatpush1.msra.mxu0 %v543
    %565 = vmatprep.subr.mxu0 0.0
    %566 = vmatpush1.msra.mxu0 %v544
    %567 = vmatprep.subr.mxu0 0.0
    %568 = vmatpush1.msra.mxu0 %v545
    %569 = vmatprep.subr.mxu0 0.0
    %570 = vmatpush1.msra.mxu0 %v546
    %571 = vmatprep.subr.mxu0 0.0
    %572 = vmatpush1.msra.mxu0 %v547
    %573 = vmatprep.subr.mxu0 0.0
    %574 = vmatpush1.msra.mxu0 %v548
    %575 = vmatprep.subr.mxu0 0.0
    %576 = vmatpush1.msra.mxu0 %v549
    %577 = vmatprep.subr.mxu0 0.0
    %578 = vmatpush1.msra.mxu0 %v550
    %579 = vmatprep.subr.mxu0 0.0
    %580 = vmatpush1.msra.mxu0 %v551
    %581 = vmatprep.subr.mxu0 0.0
    %582 = vmatpush1.msra.mxu0 %v552
    %583 = vmatprep.subr.mxu0 0.0
    %584 = vmatpush1.msra.mxu0 %v553
    %585 = vmatprep.subr.mxu0 0.0
    %586 = vmatpush1.msra.mxu0 0.0
    %587 = vmatprep.subr.mxu0 0.0
    %588 = vmatpush1.msra.mxu0 0.0
    %589 = vmatprep.subr.mxu0 0.0
    %590 = vmatpush1.msra.mxu0 0.0
    %591 = vmatprep.subr.mxu0 0.0
    %592 = vmatpush1.msra.mxu0 0.0
    %593 = vmatprep.subr.mxu0 0.0
    %594 = vmatpush1.msra.mxu0 0.0
    %595 = vmatprep.subr.mxu0 0.0
    %596 = vmatpush1.msra.mxu0 0.0
    %597 = vmatprep.subr.mxu0 0.0
    %598 = vmatpush1.msra.mxu0 0.0
    %599 = vmatprep.subr.mxu0 0.0
    %600 = vmatpush1.msra.mxu0 0.0
    %601 = vmatprep.subr.mxu0 0.0
    %602 = vmatpush1.msra.mxu0 0.0
    %603 = vmatprep.subr.mxu0 0.0
    %604 = vmatpush1.msra.mxu0 0.0
    %605 = vmatprep.subr.mxu0 0.0
    %606 = vmatpush1.msra.mxu0 0.0
    %607 = vmatprep.subr.mxu0 0.0
    %608 = vmatpush1.msra.mxu0 0.0
    %609 = vmatprep.subr.mxu0 0.0
    %610 = vmatpush1.msra.mxu0 0.0
    %611 = vmatprep.subr.mxu0 0.0
    %612 = vmatpush1.msra.mxu0 0.0
    %613 = vmatprep.subr.mxu0 0.0
    %614 = vmatpush1.msra.mxu0 0.0
    %615 = vmatprep.subr.mxu0 0.0
    %616 = vmatpush1.msra.mxu0 0.0
    %617 = vmatprep.subr.mxu0 0.0
    %618 = vmatpush1.msra.mxu0 0.0
    %619 = vmatprep.subr.mxu0 0.0
    %620 = vmatpush1.msra.mxu0 0.0
    %621 = vmatprep.subr.mxu0 0.0
    %622 = vmatpush1.msra.mxu0 0.0
    %623 = vmatprep.subr.mxu0 0.0
    %624 = vmatpush1.msra.mxu0 0.0
    %625 = vmatprep.mubr.f32.mxu0 0.0
    %626 = vmatmul.mubr.f32.gmra.mrb[0].mxu0 %v556
    %v627 = vpop.f32.mrb[0].mxu0
    %v628 = vadd.f32 0.0, %v627
    %v629 = vpop.f32.mrb[0].mxu0
    %630 = vmatprep.mubr.f32.mxu0 0.0
    %631 = vmatmul.mubr.f32.gmra.mrb[0].mxu0 %v559
    %v632 = vpop.f32.mrb[0].mxu0
    %v633 = vadd.f32 0.0, %v632
    %v634 = vpop.f32.mrb[0].mxu0
    %635 = vdwg.mxu0
    %638 = vrot.lane.b32.xlu0 %v628, 64
    %v639 = vpop.permute.xlu0 %638
    %640 = vrot.lane.b32.xlu0 %v633, 64
    %v641 = vpop.permute.xlu0 %640
    %v644 = vadd.f32 %v327, %v639
    %v645 = vadd.f32 %v332, %v641
    %v646 = vld [vmem:[%s6] sm:$0x1]
    %v648 = vlaneseq
    %v649 = vshrl.u32 %v648, 7
    %v650 = vsub.s32 0, %v649
    %v651 = vrot.slane %v646, %v650
    %652 = vrot.lane.b32.xlu0 %v651, 64
    %v653 = vpop.permute.xlu0 %652
    %v655 = vadd.f32 %v644, %v653
    %v656 = vadd.f32 %v645, %v653
    %v657 = vtanh.pop %v655
    %v658 = vtanh.pop %v656
    %v659 = vmul.f32 %v353, %v39
    %v660 = vmul.f32 %v355, %v40
    %v661 = vsub.f32 1.0, %v353
    %v662 = vsub.f32 1.0, %v355
    %665 = vrot.lane.b32.xlu0 %v657, 64
    %v666 = vpop.permute.xlu0 %665
    %667 = vrot.lane.b32.xlu0 %v658, 64
    %v668 = vpop.permute.xlu0 %667
    %v671 = vmul.f32 %v661, %v666
    %v672 = vmul.f32 %v662, %v668
    %v673 = vadd.f32 %v659, %v671
    %v674 = vadd.f32 %v660, %v672
    %675 = vst.msk [vmem:[#allocation2] sm:$0xff] %vm536, %v673
    %676 = vst.msk [vmem:[#allocation2 + $0x8] sm:$0xff] %vm536, %v674
    %v677 = vmax.f32 %v673, 0.0
    %v678 = vmax.f32 %v674, 0.0
    %v679 = vld [vmem:[%s7] sm:$0xff]
    %v680 = vld [vmem:[%s7 + $0x8] sm:$0xff]
    %v681 = vld [vmem:[%s7 + $0x10] sm:$0xff]
    %v682 = vld [vmem:[%s7 + $0x18] sm:$0xff]
    %v683 = vld [vmem:[%s8] sm:$0x1]
    %v685 = vlaneseq
    %v686 = vshrl.u32 %v685, 7
    %v687 = vsub.s32 0, %v686
    %v688 = vrot.slane %v683, %v687
    %v691 = vsel %vm536, %v677, 0
    %v694 = vsel %vm536, %v678, 0
    %696 = vmatprep.subr.mxu0 0.0
    %697 = vmatpush1.msra.mxu0 %v679
    %698 = vmatprep.subr.mxu0 0.0
    %699 = vmatpush1.msra.mxu0 %v680
    %700 = vmatprep.subr.mxu0 0.0
    %701 = vmatpush1.msra.mxu0 %v681
    %702 = vmatprep.subr.mxu0 0.0
    %703 = vmatpush1.msra.mxu0 %v682
    %704 = vmatprep.subr.mxu0 0.0
    %705 = vmatpush1.msra.mxu0 0.0
    %706 = vmatprep.subr.mxu0 0.0
    %707 = vmatpush1.msra.mxu0 0.0
    %708 = vmatprep.subr.mxu0 0.0
    %709 = vmatpush1.msra.mxu0 0.0
    %710 = vmatprep.subr.mxu0 0.0
    %711 = vmatpush1.msra.mxu0 0.0
    %712 = vmatprep.subr.mxu0 0.0
    %713 = vmatpush1.msra.mxu0 0.0
    %714 = vmatprep.subr.mxu0 0.0
    %715 = vmatpush1.msra.mxu0 0.0
    %716 = vmatprep.subr.mxu0 0.0
    %717 = vmatpush1.msra.mxu0 0.0
    %718 = vmatprep.subr.mxu0 0.0
    %719 = vmatpush1.msra.mxu0 0.0
    %720 = vmatprep.subr.mxu0 0.0
    %721 = vmatpush1.msra.mxu0 0.0
    %722 = vmatprep.subr.mxu0 0.0
    %723 = vmatpush1.msra.mxu0 0.0
    %724 = vmatprep.subr.mxu0 0.0
    %725 = vmatpush1.msra.mxu0 0.0
    %726 = vmatprep.subr.mxu0 0.0
    %727 = vmatpush1.msra.mxu0 0.0
    %728 = vmatprep.subr.mxu0 0.0
    %729 = vmatpush1.msra.mxu0 0.0
    %730 = vmatprep.subr.mxu0 0.0
    %731 = vmatpush1.msra.mxu0 0.0
    %732 = vmatprep.subr.mxu0 0.0
    %733 = vmatpush1.msra.mxu0 0.0
    %734 = vmatprep.subr.mxu0 0.0
    %735 = vmatpush1.msra.mxu0 0.0
    %736 = vmatprep.subr.mxu0 0.0
    %737 = vmatpush1.msra.mxu0 0.0
    %738 = vmatprep.subr.mxu0 0.0
    %739 = vmatpush1.msra.mxu0 0.0
    %740 = vmatprep.subr.mxu0 0.0
    %741 = vmatpush1.msra.mxu0 0.0
    %742 = vmatprep.subr.mxu0 0.0
    %743 = vmatpush1.msra.mxu0 0.0
    %744 = vmatprep.subr.mxu0 0.0
    %745 = vmatpush1.msra.mxu0 0.0
    %746 = vmatprep.subr.mxu0 0.0
    %747 = vmatpush1.msra.mxu0 0.0
    %748 = vmatprep.subr.mxu0 0.0
    %749 = vmatpush1.msra.mxu0 0.0
    %750 = vmatprep.subr.mxu0 0.0
    %751 = vmatpush1.msra.mxu0 0.0
    %752 = vmatprep.subr.mxu0 0.0
    %753 = vmatpush1.msra.mxu0 0.0
    %754 = vmatprep.subr.mxu0 0.0
    %755 = vmatpush1.msra.mxu0 0.0
    %756 = vmatprep.subr.mxu0 0.0
    %757 = vmatpush1.msra.mxu0 0.0
    %758 = vmatprep.subr.mxu0 0.0
    %759 = vmatpush1.msra.mxu0 0.0
    %760 = vmatprep.mubr.f32.mxu0 0.0
    %761 = vmatmul.mubr.f32.gmra.mrb[0].mxu0 %v691
    %v762 = vpop.f32.mrb[0].mxu0
    %v763 = vadd.f32 %v688, %v762
    %v764 = vpop.f32.mrb[0].mxu0
    %765 = vmatprep.mubr.f32.mxu0 0.0
    %766 = vmatmul.mubr.f32.gmra.mrb[0].mxu0 %v694
    %v767 = vpop.f32.mrb[0].mxu0
    %v768 = vadd.f32 %v688, %v767
    %v769 = vpop.f32.mrb[0].mxu0
    %770 = vdwg.mxu0
    %vm771 = vcmask 56320
    %772 = vst.msk [vmem:[%s10] sm:$0xff] %vm771, %v763
    %773 = vst.msk [vmem:[%s10 + $0x8] sm:$0xff] %vm771, %v768
    // Predicated region
    $region38: #{_tgconvgru_forward.1} parent=1 // pred_check
      _
    $region39: #{_tgconvgru_forward.1} parent=1 // pred_check_branch
      %775 = sbr.rel (0) target = $region41
    $region40: #{_tgconvgru_forward.1} parent=1 // pred_region
      %s777 = ssub.s32 256, 256
      %778 = vsyncadd [#allocation3], %s777
      %s779 = sshll.u32 [#allocation2], 4
      %s780 = int_to_ptr.vmem [resolvable:$true] %s779
      %785 = dma.vmem_to_hbm [thread:$0]  %s780, 256, %s9, [#allocation3], 128, 128, 8
    $region41: #{_tgconvgru_forward.1} parent=1 // pred_fallthru
      _
    // Predicated region
    $region42: #{_tgconvgru_forward.1} parent=1 // pred_check
      _
    $region43: #{_tgconvgru_forward.1} parent=1 // pred_check_branch
      %787 = sbr.rel (0) target = $region45
    $region44: #{_tgconvgru_forward.1} parent=1 // pred_region
      _
    $region45: #{_tgconvgru_forward.1} parent=1 // pred_fallthru
      _
    // Predicated region
    $region46: #{_tgconvgru_forward.1} parent=1 // pred_check
      _
    $region47: #{_tgconvgru_forward.1} parent=1 // pred_check_branch
      %789 = sbr.rel (0) target = $region49
    $region48: #{_tgconvgru_forward.1} parent=1 // pred_region
      %790 = dma.done [#allocation3], 256
    $region49: #{_tgconvgru_forward.1} parent=1 // pred_fallthru
      _
    // Predicated region
    $region50: #{_tgconvgru_forward.1} parent=1 // pred_check
      _
    $region51: #{_tgconvgru_forward.1} parent=1 // pred_check_branch
      %792 = sbr.rel (0) target = $region53
    $region52: #{_tgconvgru_forward.1} parent=1 // pred_region
      _
    $region53: #{_tgconvgru_forward.1} parent=1 // pred_fallthru
      _
    %793 = vsyncpa [#allocation3], 1

</llo_original>
